<compile_context>
chip_gen: v7x
topology: tpu7x:2x2x1
jax: 0.10.0
libtpu: 0.0.40
codegen_flags: <defaults>
</compile_context>

<pallas_src>
import functools

import jax
import jax.numpy as jnp
from jax.experimental import pallas as pl
from jax.experimental.pallas import tpu as pltpu


def _hash_bits_u32(idx_u32, seed_u32):
    """Stateless counter-based PRNG: murmur3 finalizer of (idx ^ seed) -> uniform uint32."""
    h = idx_u32 ^ seed_u32
    h = (h ^ (h >> 16)) * jnp.uint32(0x85EBCA6B)
    h = (h ^ (h >> 13)) * jnp.uint32(0xC2B2AE35)
    return h ^ (h >> 16)


def _bnn_drop_kernel(seed_ref, b2_ref, x_ref, w1_ref, b1_ref, w2_ref, y_ref,
                     *, drop_threshold):
    tile_n = x_ref.shape[0]
    x = x_ref[...]                                              # [TILE_N, F] f32

    # fc1 (MXU): [TILE_N, F] @ [F, H] + [1, H], then ReLU.
    h = jnp.dot(x, w1_ref[...], preferred_element_type=jnp.float32) + b1_ref[...]
    h = jnp.maximum(h, 0.0)

    # Per-tile dropout bookkeeping (dead code when drop_threshold == 0).
    seed = seed_ref[0].astype(jnp.uint32)
    thresh = jnp.uint32(drop_threshold)
    row0 = (pl.program_id(0) * tile_n).astype(jnp.uint32)       # first global row of tile

    if drop_threshold > 0:
        # Dropout 1 on hidden activations: keep with prob 1-p.
        # The 1/(1-p) scale is folded into w2 in the wrapper.
        hidden = h.shape[1]
        rows = jax.lax.broadcasted_iota(jnp.uint32, (tile_n, hidden), 0) + row0
        cols = jax.lax.broadcasted_iota(jnp.uint32, (tile_n, hidden), 1)
        bits1 = _hash_bits_u32(rows * jnp.uint32(hidden) + cols, seed)
        h = jnp.where(bits1 >= thresh, h, 0.0)

    # fc2: contract over H -> lane-dense [1, TILE_N] row (+ scalar bias from SMEM).
    y = jax.lax.dot_general(w2_ref[...], h, (((1,), (1,)), ((), ())),
                            preferred_element_type=jnp.float32) + b2_ref[0]

    if drop_threshold > 0:
        # Dropout 2 on the output row; only (1, TILE_N) random draws.
        rows2 = jax.lax.broadcasted_iota(jnp.uint32, (1, tile_n), 1) + row0
        bits2 = _hash_bits_u32(rows2, seed ^ jnp.uint32(0x9E3779B9))
        y = jnp.where(bits2 >= thresh, y, 0.0)

    y_ref[...] = y


def bnn_drop_forward(x, params, seed, drop_prob, *, tile_n=1024):
    """BNNDrop forward with already-sampled Bayesian weights.

    x: [N, F] f32.  params: w1 [F,H], b1 [1,H], w2 [H,1], b2 [1,1].
    Returns y: [N, 1] f32 (training-mode dropout semantics, like the PyTorch module).
    """
    n, f = x.shape
    hidden = params["w1"].shape[1]

    # Batch tile: multiple of 128 so the lane-dense output block stays aligned.
    tile_n = max(128, min(4096, (int(tile_n) // 128) * 128))
    num_tiles = pl.cdiv(n, tile_n)
    n_pad = num_tiles * tile_n
    if n_pad != n:
        x = jnp.pad(x, ((0, n_pad - n), (0, 0)))

    drop_prob = float(drop_prob)
    if drop_prob > 0.0:
        drop_threshold = min(int(round(drop_prob * (1 << 32))), (1 << 32) - 1)
    else:
        drop_threshold = 0
    inv_keep = 1.0 / (1.0 - drop_prob) if drop_prob < 1.0 else 0.0

    # Fold both dropout keep-scales into fc2 (fc2 is linear => mathematically equivalent).
    w2_row = (params["w2"].astype(jnp.float32) * jnp.float32(inv_keep * inv_keep)).reshape(1, hidden)
    b2_fold = (params["b2"].astype(jnp.float32) * jnp.float32(inv_keep)).reshape(1)
    seed_arr = jnp.asarray(seed, dtype=jnp.int32).reshape(1)

    kernel = functools.partial(_bnn_drop_kernel, drop_threshold=drop_threshold)
    out = pl.pallas_call(
        kernel,
        out_shape=jax.ShapeDtypeStruct((1, n_pad), jnp.float32),
        grid=(num_tiles,),
        in_specs=[
            pl.BlockSpec(memory_space=pltpu.MemorySpace.SMEM),        # seed (1,)
            pl.BlockSpec(memory_space=pltpu.MemorySpace.SMEM),        # b2   (1,)
            pl.BlockSpec((tile_n, f), lambda i: (i, 0)),              # x tile
            pl.BlockSpec((f, hidden), lambda i: (0, 0)),              # w1 (VMEM-resident)
            pl.BlockSpec((1, hidden), lambda i: (0, 0)),              # b1 (VMEM-resident)
            pl.BlockSpec((1, hidden), lambda i: (0, 0)),              # w2 row (VMEM-resident)
        ],
        out_specs=pl.BlockSpec((1, tile_n), lambda i: (0, i)),        # lane-dense row
        compiler_params=pltpu.CompilerParams(
            dimension_semantics=("parallel",),
            vmem_limit_bytes=32 * 1024 * 1024,
        ),
    )(seed_arr, b2_fold, x, params["w1"], params["b1"], w2_row)

    return out[0, :n].reshape(n, 1)


def _sample_bayes_linear(key, fan_in, fan_out):
    """BayesLinear parameter setup + one reparameterized weight sample (glue JAX)."""
    k_wmu, k_weps, k_bmu, k_beps = jax.random.split(key, 4)
    bound = 1.0 / jnp.sqrt(jnp.float32(fan_in))
    w_mu = jax.random.uniform(k_wmu, (fan_in, fan_out), jnp.float32, -bound, bound)
    b_mu = jax.random.uniform(k_bmu, (1, fan_out), jnp.float32, -bound, bound)
    w_rho = jnp.full((fan_in, fan_out), -3.0, jnp.float32)
    b_rho = jnp.full((1, fan_out), -3.0, jnp.float32)
    w = w_mu + jax.nn.softplus(w_rho) * jax.random.normal(k_weps, w_mu.shape, jnp.float32)
    b = b_mu + jax.nn.softplus(b_rho) * jax.random.normal(k_beps, b_mu.shape, jnp.float32)
    return w, b


if __name__ == "__main__":
    n_features = 32          # fc1: 32 -> 16, fc2: 16 -> 1
    hidden = n_features // 2
    batch = 512
    drop_prob = 0.25

    root = jax.random.PRNGKey(0)
    k_x, k_l1, k_l2 = jax.random.split(root, 3)

    x = jax.random.normal(k_x, (batch, n_features), jnp.float32)
    w1, b1 = _sample_bayes_linear(k_l1, n_features, hidden)
    w2, b2 = _sample_bayes_linear(k_l2, hidden, 1)
    params = {"w1": w1, "b1": b1, "w2": w2, "b2": b2}

    seed = jnp.array([42], dtype=jnp.int32)

    # Dropout disabled: must match the plain-JAX forward exactly (up to f32 rounding).
    y_nodrop = jax.block_until_ready(bnn_drop_forward(x, params, seed, 0.0, tile_n=128))
    h_ref = jnp.maximum(jnp.dot(x, w1, precision=jax.lax.Precision.HIGHEST) + b1, 0.0)
    y_ref = jnp.dot(h_ref, w2, precision=jax.lax.Precision.HIGHEST) + b2
    assert y_nodrop.shape == (batch, 1) and y_nodrop.dtype == jnp.float32
    assert jnp.allclose(y_nodrop, y_ref, atol=1e-3, rtol=1e-3)

    # Dropout enabled (training-mode semantics): ~drop_prob of the outputs are zeroed.
    y = jax.block_until_ready(bnn_drop_forward(x, params, seed, drop_prob, tile_n=128))
    assert y.shape == (batch, 1) and y.dtype == jnp.float32
    assert bool(jnp.all(jnp.isfinite(y)))
    zero_frac = float(jnp.mean((y == 0.0).astype(jnp.float32)))
    assert 0.10 < zero_frac < 0.45, f"unexpected dropout-2 zero fraction {zero_frac}"

    print("KERNEL_OK")
</pallas_src>

<mosaic_0001>
module attributes {stable_mosaic.version = 11 : i64} {
  func.func @_bnn_drop_kernel(%arg0: i32, %arg1: memref<1xi32, #tpu.memory_space<smem>>, %arg2: memref<1xf32, #tpu.memory_space<smem>>, %arg3: memref<128x32xf32, #tpu.memory_space<vmem>>, %arg4: memref<32x16xf32, #tpu.memory_space<vmem>>, %arg5: memref<1x16xf32, #tpu.memory_space<vmem>>, %arg6: memref<1x16xf32, #tpu.memory_space<vmem>>, %arg7: memref<1x128xf32, #tpu.memory_space<vmem>>) attributes {dimension_semantics = [#tpu.dimension_semantics<parallel>], iteration_bounds = array<i64: 4>, scalar_prefetch = 0 : i64, scratch_operands = 0 : i64, tpu.core_type = #tpu.core_type<tc>, window_params = [{transform_indices = @transform_0, window_bounds = array<i64: 1>}, {transform_indices = @transform_1, window_bounds = array<i64: 1>}, {transform_indices = @transform_2, window_bounds = array<i64: 128, 32>}, {pipeline_mode = #tpu.pipeline_mode<synchronous>, transform_indices = @transform_3, window_bounds = array<i64: 32, 16>}, {pipeline_mode = #tpu.pipeline_mode<synchronous>, transform_indices = @transform_4, window_bounds = array<i64: 1, 16>}, {pipeline_mode = #tpu.pipeline_mode<synchronous>, transform_indices = @transform_5, window_bounds = array<i64: 1, 16>}, {transform_indices = @transform_6, window_bounds = array<i64: 1, 128>}]} {
    %c0 = arith.constant 0 : index
    %c0_0 = arith.constant 0 : index
    %0 = vector.load %arg3[%c0, %c0_0] : memref<128x32xf32, #tpu.memory_space<vmem>>, vector<128x32xf32>
    %c0_1 = arith.constant 0 : index
    %c0_2 = arith.constant 0 : index
    %1 = vector.load %arg4[%c0_1, %c0_2] : memref<32x16xf32, #tpu.memory_space<vmem>>, vector<32x16xf32>
    %cst = arith.constant dense<0.000000e+00> : vector<128x16xf32>
    %2 = tpu.matmul %0, %1, %cst {dimension_numbers = #tpu.dot_dimension_numbers<[1], [0], [0], [1], [0, 0, 1, 1], [], []>} : vector<128x32xf32>, vector<32x16xf32>, vector<128x16xf32> -> vector<128x16xf32>
    %c0_3 = arith.constant 0 : index
    %c0_4 = arith.constant 0 : index
    %3 = vector.load %arg5[%c0_3, %c0_4] : memref<1x16xf32, #tpu.memory_space<vmem>>, vector<1x16xf32>
    %4 = vector.broadcast %3 : vector<1x16xf32> to vector<128x16xf32>
    %5 = arith.addf %2, %4 : vector<128x16xf32>
    %cst_5 = arith.constant 0.000000e+00 : f32
    %6 = vector.broadcast %cst_5 : f32 to vector<128x16xf32>
    %7 = arith.maximumf %5, %6 : vector<128x16xf32>
    %c0_6 = arith.constant 0 : index
    %c0_7 = arith.constant 0 : index
    %8 = vector.load %arg6[%c0_6, %c0_7] : memref<1x16xf32, #tpu.memory_space<vmem>>, vector<1x16xf32>
    %cst_8 = arith.constant dense<0.000000e+00> : vector<1x128xf32>
    %9 = tpu.matmul %8, %7, %cst_8 {dimension_numbers = #tpu.dot_dimension_numbers<[1], [1], [0], [0], [0, 0, 1, 0], [], []>} : vector<1x16xf32>, vector<128x16xf32>, vector<1x128xf32> -> vector<1x128xf32>
    %c0_9 = arith.constant 0 : index
    %10 = memref.load %arg2[%c0_9] : memref<1xf32, #tpu.memory_space<smem>>
    %11 = vector.broadcast %10 : f32 to vector<1x128xf32>
    %12 = arith.addf %9, %11 : vector<1x128xf32>
    %c0_10 = arith.constant 0 : index
    %c0_11 = arith.constant 0 : index
    %13 = vector.load %arg7[%c0_10, %c0_11] : memref<1x128xf32, #tpu.memory_space<vmem>>, vector<1x128xf32>
    tpu.vector_store %arg7[%c0_10, %c0_11], %12 {strides = array<i32>} : memref<1x128xf32, #tpu.memory_space<vmem>>, vector<1x128xf32>,
    return
  }
  func.func @transform_0(%arg0: i32) -> i32 {
    %c0_i32 = arith.constant 0 : i32
    %c0_i32_0 = arith.constant 0 : i32
    return %c0_i32 : i32
  }
  func.func @transform_1(%arg0: i32) -> i32 {
    %c0_i32 = arith.constant 0 : i32
    %c0_i32_0 = arith.constant 0 : i32
    return %c0_i32 : i32
  }
  func.func @transform_2(%arg0: i32) -> (i32, i32) {
    %c0_i32 = arith.constant 0 : i32
    %c0_i32_0 = arith.constant 0 : i32
    return %arg0, %c0_i32 : i32, i32
  }
  func.func @transform_3(%arg0: i32) -> (i32, i32) {
    %c0_i32 = arith.constant 0 : i32
    %c0_i32_0 = arith.constant 0 : i32
    %c0_i32_1 = arith.constant 0 : i32
    return %c0_i32, %c0_i32_0 : i32, i32
  }
  func.func @transform_4(%arg0: i32) -> (i32, i32) {
    %c0_i32 = arith.constant 0 : i32
    %c0_i32_0 = arith.constant 0 : i32
    %c0_i32_1 = arith.constant 0 : i32
    return %c0_i32, %c0_i32_0 : i32, i32
  }
  func.func @transform_5(%arg0: i32) -> (i32, i32) {
    %c0_i32 = arith.constant 0 : i32
    %c0_i32_0 = arith.constant 0 : i32
    %c0_i32_1 = arith.constant 0 : i32
    return %c0_i32, %c0_i32_0 : i32, i32
  }
  func.func @transform_6(%arg0: i32) -> (i32, i32) {
    %c0_i32 = arith.constant 0 : i32
    %c0_i32_0 = arith.constant 0 : i32
    return %c0_i32, %arg0 : i32, i32
  }
}

</mosaic_0001>

<llo_original>
// kernel: tpu_custom_call.1
$region0: #{tpu_custom_call.1}
  #allocation0 [shape = 'u32[]', space=smem, size = 0x4, offset = 0x4, fixed_abs, tag = 'smem constant byte address 0x4 - core index']
  #allocation1 [shape = 'u32[144,128]{1,0:T(1,128)}', space=vmem, size = 0x12000, scoped, tag = 'internal scratch']
  #allocation2 [shape = 's32[1]{0:T(128)S(6)}', space=smem, size = 0x200, scoped, tag = 'scoped memory for tpu_custom_call.1']
  #allocation3 [shape = 'f32[1]{0:T(128)S(6)}', space=smem, size = 0x200, scoped, tag = 'scoped memory for tpu_custom_call.1']
  %s0 = inlined_call_operand.<no memory space> [shape: s32[1], index: 0, kind: input, shape index: {}]
  %s1 = inlined_call_operand.<no memory space> [shape: f32[1], index: 1, kind: input, shape index: {}]
  %s2 = inlined_call_operand.vmem [shape: f32[512,32], index: 2, kind: input, shape index: {}]
  %s3 = inlined_call_operand.vmem [shape: f32[32,16], index: 3, kind: input, shape index: {}]
  %s4 = inlined_call_operand.vmem [shape: f32[1,16], index: 4, kind: input, shape index: {}]
  %s5 = inlined_call_operand.vmem [shape: f32[1,16], index: 5, kind: input, shape index: {}]
  %s6 = inlined_call_operand.hbm [shape: f32[1,512], index: 6, kind: output, shape index: {}]
  %s7 = sld [smem:[#allocation0]]
  $region57: #{tpu_custom_call.1} parent=0
    _
  %s9 = ssub.s32 1, %s7
  %s10 = scalar_select 0, %s9, %s7
  %11 = sst [smem:[#allocation2]] %s0
  %12 = sst [smem:[#allocation3]] %s1
  $region1: #{tpu_custom_call.1} parent=0
    #allocation4 [shape = 'u8[1024]{0}', space=vmem, size = 0x400, scoped, tag = 'output window, operand 0']
    #allocation5 [shape = 's32[2]{0}', space=sflag, size = 0x8, scoped, tag = 'scoped memory for tpu_custom_call.1']
    %13 = vsyncpa [#allocation5], 0
    %s14 = scalar_lea.sflag [#allocation5], 1
    %15 = vsyncpa %s14, 0
    loop: start=0, step=1, limit=6
    $region2: #{tpu_custom_call.1} parent=1 // loop_pre_header
      _
    $region3: #{tpu_custom_call.1} parent=1 // loop_header
      %s17 = sphi 0, %s21
      %p18 = scmp.ge.s32.totalorder %s17, 6
      %s25 = sphi 0, %s25
      %s27 = sphi 0, %s25
      %s28 = sphi 0, %s27
      %s42 = sphi 0, %s28
      %s46 = sphi 0, %s46
      %s48 = sphi 0, %s46
      %s49 = sphi 0, %s48
      %s63 = sphi 0, %s49
      %s69 = sphi 0, %s71
      %s72 = sphi 0, %s69
      %s73 = sphi 0, %s72
      %s89 = sphi 0, %s73
      %s93 = sphi 0, %s93
      %s95 = sphi 0, %s93
      %s96 = sphi 0, %s95
      %s110 = sphi 0, %s96
      %s114 = sphi 0, %s114
      %s116 = sphi 0, %s114
      %s117 = sphi 0, %s116
      %s131 = sphi 0, %s117
      %s135 = sphi 0, %s135
      %s137 = sphi 0, %s135
      %s138 = sphi 0, %s137
      %s152 = sphi 0, %s138
      %s158 = sphi 0, %s160
      %s161 = sphi 0, %s158
      %s162 = sphi 0, %s161
      %s178 = sphi 0, %s162
    $region4: #{tpu_custom_call.1} parent=1 // loop_header_branch
      %20 = sbr.rel (%p18) target = $region8
    $region5: #{tpu_custom_call.1} parent=1 // loop_body
      %s22 = ssub.s32 %s17, 1
      %s23 = ssub.s32 %s17, 2
      %s24 = sadd.s32 %s17, 1
      %s26 = sadd.s32 %s25, 1
      %p29 = scmp.eq.s32.totalorder %s17, 3
      %p30 = scmp.ne.s32.totalorder %s25, %s27
      %p31 = scmp.eq.s32.totalorder %s17, 0
      %p32 = por %p30, %p31
      %p33 = scmp.ne.s32.totalorder %s25, %s27
      %p34 = scmp.eq.s32.totalorder %s22, 3
      %p35 = por %p33, %p34
      %p36 = scmp.ne.s32.totalorder %s27, %s28
      %p37 = scmp.eq.s32.totalorder %s22, 0
      %p38 = por %p36, %p37
      %p39 = scmp.ne.s32.totalorder %s27, %s28
      %p40 = scmp.eq.s32.totalorder %s23, 3
      %p41 = por %p39, %p40
      %p43 = scmp.ne.s32.totalorder %s28, %s42
      %p44 = scmp.eq.s32.totalorder %s23, 0
      %p45 = por %p43, %p44
      %s47 = sadd.s32 %s46, 1
      %p50 = scmp.eq.s32.totalorder %s17, 3
      %p51 = scmp.ne.s32.totalorder %s46, %s48
      %p52 = scmp.eq.s32.totalorder %s17, 0
      %p53 = por %p51, %p52
      %p54 = scmp.ne.s32.totalorder %s46, %s48
      %p55 = scmp.eq.s32.totalorder %s22, 3
      %p56 = por %p54, %p55
      %p57 = scmp.ne.s32.totalorder %s48, %s49
      %p58 = scmp.eq.s32.totalorder %s22, 0
      %p59 = por %p57, %p58
      %p60 = scmp.ne.s32.totalorder %s48, %s49
      %p61 = scmp.eq.s32.totalorder %s23, 3
      %p62 = por %p60, %p61
      %p64 = scmp.ne.s32.totalorder %s49, %s63
      %p65 = scmp.eq.s32.totalorder %s23, 0
      %p66 = por %p64, %p65
      %s67 = ssub.s32 %s17, %s24
      %p68 = scmp.eq.s32.totalorder %s67, 0
      %s70 = sadd.s32 %s69, 1
      %s71 = scalar_select %p68, %s69, %s70
      %p74 = pneg %p68
      %p75 = scmp.eq.s32.totalorder %s17, 3
      %p76 = por %p74, %p75
      %p77 = scmp.ne.s32.totalorder %s69, %s72
      %p78 = scmp.eq.s32.totalorder %s17, 0
      %p79 = por %p77, %p78
      %p80 = scmp.ne.s32.totalorder %s69, %s72
      %p81 = scmp.eq.s32.totalorder %s22, 3
      %p82 = por %p80, %p81
      %p83 = scmp.ne.s32.totalorder %s72, %s73
      %p84 = scmp.eq.s32.totalorder %s22, 0
      %p85 = por %p83, %p84
      %p86 = scmp.ne.s32.totalorder %s72, %s73
      %p87 = scmp.eq.s32.totalorder %s23, 3
      %p88 = por %p86, %p87
      %p90 = scmp.ne.s32.totalorder %s73, %s89
      %p91 = scmp.eq.s32.totalorder %s23, 0
      %p92 = por %p90, %p91
      %s94 = sadd.s32 %s93, 1
      %p97 = scmp.eq.s32.totalorder %s17, 3
      %p98 = scmp.ne.s32.totalorder %s93, %s95
      %p99 = scmp.eq.s32.totalorder %s17, 0
      %p100 = por %p98, %p99
      %p101 = scmp.ne.s32.totalorder %s93, %s95
      %p102 = scmp.eq.s32.totalorder %s22, 3
      %p103 = por %p101, %p102
      %p104 = scmp.ne.s32.totalorder %s95, %s96
      %p105 = scmp.eq.s32.totalorder %s22, 0
      %p106 = por %p104, %p105
      %p107 = scmp.ne.s32.totalorder %s95, %s96
      %p108 = scmp.eq.s32.totalorder %s23, 3
      %p109 = por %p107, %p108
      %p111 = scmp.ne.s32.totalorder %s96, %s110
      %p112 = scmp.eq.s32.totalorder %s23, 0
      %p113 = por %p111, %p112
      %s115 = sadd.s32 %s114, 1
      %p118 = scmp.eq.s32.totalorder %s17, 3
      %p119 = scmp.ne.s32.totalorder %s114, %s116
      %p120 = scmp.eq.s32.totalorder %s17, 0
      %p121 = por %p119, %p120
      %p122 = scmp.ne.s32.totalorder %s114, %s116
      %p123 = scmp.eq.s32.totalorder %s22, 3
      %p124 = por %p122, %p123
      %p125 = scmp.ne.s32.totalorder %s116, %s117
      %p126 = scmp.eq.s32.totalorder %s22, 0
      %p127 = por %p125, %p126
      %p128 = scmp.ne.s32.totalorder %s116, %s117
      %p129 = scmp.eq.s32.totalorder %s23, 3
      %p130 = por %p128, %p129
      %p132 = scmp.ne.s32.totalorder %s117, %s131
      %p133 = scmp.eq.s32.totalorder %s23, 0
      %p134 = por %p132, %p133
      %s136 = sadd.s32 %s135, 1
      %p139 = scmp.eq.s32.totalorder %s17, 3
      %p140 = scmp.ne.s32.totalorder %s135, %s137
      %p141 = scmp.eq.s32.totalorder %s17, 0
      %p142 = por %p140, %p141
      %p143 = scmp.ne.s32.totalorder %s135, %s137
      %p144 = scmp.eq.s32.totalorder %s22, 3
      %p145 = por %p143, %p144
      %p146 = scmp.ne.s32.totalorder %s137, %s138
      %p147 = scmp.eq.s32.totalorder %s22, 0
      %p148 = por %p146, %p147
      %p149 = scmp.ne.s32.totalorder %s137, %s138
      %p150 = scmp.eq.s32.totalorder %s23, 3
      %p151 = por %p149, %p150
      %p153 = scmp.ne.s32.totalorder %s138, %s152
      %p154 = scmp.eq.s32.totalorder %s23, 0
      %p155 = por %p153, %p154
      %s156 = ssub.s32 %s17, %s24
      %p157 = scmp.eq.s32.totalorder %s156, 0
      %s159 = sadd.s32 %s158, 1
      %s160 = scalar_select %p157, %s158, %s159
      %p163 = pneg %p157
      %p164 = scmp.eq.s32.totalorder %s17, 3
      %p165 = por %p163, %p164
      %p166 = scmp.ne.s32.totalorder %s158, %s161
      %p167 = scmp.eq.s32.totalorder %s17, 0
      %p168 = por %p166, %p167
      %p169 = scmp.ne.s32.totalorder %s158, %s161
      %p170 = scmp.eq.s32.totalorder %s22, 3
      %p171 = por %p169, %p170
      %p172 = scmp.ne.s32.totalorder %s161, %s162
      %p173 = scmp.eq.s32.totalorder %s22, 0
      %p174 = por %p172, %p173
      %p175 = scmp.ne.s32.totalorder %s161, %s162
      %p176 = scmp.eq.s32.totalorder %s23, 3
      %p177 = por %p175, %p176
      %p179 = scmp.ne.s32.totalorder %s162, %s178
      %p180 = scmp.eq.s32.totalorder %s23, 0
      %p181 = por %p179, %p180
      %p182 = scmp.le.s32.totalorder 1, %s17
      %p183 = scmp.lt.s32.totalorder %s17, 5
      %p184 = pnand %p182, %p183
      %p185 = pneg %p184
      // Predicated region
      $region9: #{tpu_custom_call.1} parent=5 // pred_check
        _
      $region10: #{tpu_custom_call.1} parent=5 // pred_check_branch
        %187 = sbr.rel (%p184) target = $region12
      $region11: #{tpu_custom_call.1} parent=5 // pred_region
        %s188 = ssub.s32 %s17, 1
        // Predicated region
        $region13: #{tpu_custom_call.1} parent=11 // pred_check
          %p189 = pneg %p38
        $region14: #{tpu_custom_call.1} parent=11 // pred_check_branch
          %191 = sbr.rel (%p189) target = $region16
        $region15: #{tpu_custom_call.1} parent=11 // pred_region
          _
        $region16: #{tpu_custom_call.1} parent=11 // pred_fallthru
          _
        // Predicated region
        $region17: #{tpu_custom_call.1} parent=11 // pred_check
          %p192 = pneg %p59
        $region18: #{tpu_custom_call.1} parent=11 // pred_check_branch
          %194 = sbr.rel (%p192) target = $region20
        $region19: #{tpu_custom_call.1} parent=11 // pred_region
          _
        $region20: #{tpu_custom_call.1} parent=11 // pred_fallthru
          _
        // Predicated region
        $region21: #{tpu_custom_call.1} parent=11 // pred_check
          %p195 = pneg %p106
        $region22: #{tpu_custom_call.1} parent=11 // pred_check_branch
          %197 = sbr.rel (%p195) target = $region24
        $region23: #{tpu_custom_call.1} parent=11 // pred_region
          _
        $region24: #{tpu_custom_call.1} parent=11 // pred_fallthru
          _
        // Predicated region
        $region25: #{tpu_custom_call.1} parent=11 // pred_check
          %p198 = pneg %p127
        $region26: #{tpu_custom_call.1} parent=11 // pred_check_branch
          %200 = sbr.rel (%p198) target = $region28
        $region27: #{tpu_custom_call.1} parent=11 // pred_region
          _
        $region28: #{tpu_custom_call.1} parent=11 // pred_fallthru
          _
        // Predicated region
        $region29: #{tpu_custom_call.1} parent=11 // pred_check
          %p201 = pneg %p148
        $region30: #{tpu_custom_call.1} parent=11 // pred_check_branch
          %203 = sbr.rel (%p201) target = $region32
        $region31: #{tpu_custom_call.1} parent=11 // pred_region
          _
        $region32: #{tpu_custom_call.1} parent=11 // pred_fallthru
          _
      $region12: #{tpu_custom_call.1} parent=5 // pred_fallthru
        _
      %p204 = scmp.lt.s32.totalorder %s17, 4
      // Predicated region
      $region33: #{tpu_custom_call.1} parent=5 // pred_check
        %p205 = pneg %p204
      $region34: #{tpu_custom_call.1} parent=5 // pred_check_branch
        %207 = sbr.rel (%p205) target = $region36
      $region35: #{tpu_custom_call.1} parent=5 // pred_region
        // Predicated region
        $region37: #{tpu_custom_call.1} parent=35 // pred_check
          %p208 = pneg %p79
        $region38: #{tpu_custom_call.1} parent=35 // pred_check_branch
          %210 = sbr.rel (%p208) target = $region40
        $region39: #{tpu_custom_call.1} parent=35 // pred_region
          %s211 = smul.u32 16, %s17
          %p212 = scmp.lt.s32.totalorder %s211, 63
          %s213 = scalar_select %p212, %s211, 63
          %s214 = smul.addr %s213, 8
          %s215 = scalar_lea.vmem %s2, %s214
          %s216 = smul.u32 16, %s17
        $region40: #{tpu_custom_call.1} parent=35 // pred_fallthru
          _
      $region36: #{tpu_custom_call.1} parent=5 // pred_fallthru
        _
      %p217 = scmp.le.s32.totalorder 1, %s17
      %p218 = scmp.lt.s32.totalorder %s17, 5
      %p219 = pnand %p217, %p218
      %p220 = pneg %p219
      // Predicated region
      $region41: #{tpu_custom_call.1} parent=5 // pred_check
        _
      $region42: #{tpu_custom_call.1} parent=5 // pred_check_branch
        %222 = sbr.rel (%p219) target = $region44
      $region43: #{tpu_custom_call.1} parent=5 // pred_region
        %s223 = ssub.s32 %s17, 1
        %p224 = pneg %p38
        %p225 = pneg %p35
        %p226 = pneg %p59
        %p227 = pneg %p56
        %s228 = smul.u32 16, %s22
        %p229 = scmp.lt.s32.totalorder %s228, 63
        %s230 = scalar_select %p229, %s228, 63
        %s231 = smul.addr %s230, 8
        %s232 = scalar_lea.vmem %s2, %s231
        %p233 = pneg %p85
        %p234 = pneg %p82
        %p235 = pneg %p106
        %p236 = pneg %p103
        %p237 = pneg %p127
        %p238 = pneg %p124
        %p239 = pneg %p148
        %p240 = pneg %p145
        %p241 = pneg %p174
        %p242 = pneg %p171
        %s243 = sand.u32 %s161, 1
        %s244 = scalar_lea.sflag [#allocation5], %s243
        %s245 = sand.u32 %s161, 1
        %s246 = scalar_lea.vmem [#allocation4], %s245
        %s247 = smul.u32 16, %s22
        %p248 = scmp.lt.s32.totalorder %s247, 63
        %s249 = scalar_select %p248, %s247, 63
        %s250 = smul.addr %s249, 8
        %s251 = scalar_lea.vmem %s2, %s250
        %s252 = smul.u32 16, %s22
        %v253 = vld [vmem:[%s251] sm:$0xff]
        %v254 = vld [vmem:[%s251 + $0x8] sm:$0xff]
        %v255 = vld [vmem:[%s251 + $0x10] sm:$0xff]
        %v256 = vld [vmem:[%s251 + $0x18] sm:$0xff]
        %v257 = vld [vmem:[%s251 + $0x20] sm:$0xff]
        %v258 = vld [vmem:[%s251 + $0x28] sm:$0xff]
        %v259 = vld [vmem:[%s251 + $0x30] sm:$0xff]
        %v260 = vld [vmem:[%s251 + $0x38] sm:$0xff]
        %v261 = vld [vmem:[%s251 + $0x40] sm:$0xff]
        %v262 = vld [vmem:[%s251 + $0x48] sm:$0xff]
        %v263 = vld [vmem:[%s251 + $0x50] sm:$0xff]
        %v264 = vld [vmem:[%s251 + $0x58] sm:$0xff]
        %v265 = vld [vmem:[%s251 + $0x60] sm:$0xff]
        %v266 = vld [vmem:[%s251 + $0x68] sm:$0xff]
        %v267 = vld [vmem:[%s251 + $0x70] sm:$0xff]
        %v268 = vld [vmem:[%s251 + $0x78] sm:$0xff]
        %v269 = vld [vmem:[%s3] sm:$0xff]
        %v270 = vld [vmem:[%s3 + $0x8] sm:$0xff]
        %v271 = vld [vmem:[%s3 + $0x10] sm:$0xff]
        %v272 = vld [vmem:[%s3 + $0x18] sm:$0xff]
        %v273 = vld [vmem:[%s4] sm:$0x1]
        %v275 = vlaneseq
        %v276 = vshrl.u32 %v275, 7
        %v277 = vsub.s32 0, %v276
        %v278 = vrot.slane %v273, %v277
        %vm280 = vcmask 261120
        %v282 = vsel %vm280, %v253, 0
        %v285 = vsel %vm280, %v254, 0
        %v288 = vsel %vm280, %v255, 0
        %v291 = vsel %vm280, %v256, 0
        %v294 = vsel %vm280, %v257, 0
        %v297 = vsel %vm280, %v258, 0
        %v300 = vsel %vm280, %v259, 0
        %v303 = vsel %vm280, %v260, 0
        %v306 = vsel %vm280, %v261, 0
        %v309 = vsel %vm280, %v262, 0
        %v312 = vsel %vm280, %v263, 0
        %v315 = vsel %vm280, %v264, 0
        %v318 = vsel %vm280, %v265, 0
        %v321 = vsel %vm280, %v266, 0
        %v324 = vsel %vm280, %v267, 0
        %v327 = vsel %vm280, %v268, 0
        %329 = vmatprep.subr.mxu0 0.0
        %330 = vmatpush1.msra.mxu0 %v269
        %331 = vmatprep.subr.mxu0 0.0
        %332 = vmatpush1.msra.mxu0 %v270
        %333 = vmatprep.subr.mxu0 0.0
        %334 = vmatpush1.msra.mxu0 %v271
        %335 = vmatprep.subr.mxu0 0.0
        %336 = vmatpush1.msra.mxu0 %v272
        %337 = vmatprep.subr.mxu0 0.0
        %338 = vmatpush1.msra.mxu0 0.0
        %339 = vmatprep.subr.mxu0 0.0
        %340 = vmatpush1.msra.mxu0 0.0
        %341 = vmatprep.subr.mxu0 0.0
        %342 = vmatpush1.msra.mxu0 0.0
        %343 = vmatprep.subr.mxu0 0.0
        %344 = vmatpush1.msra.mxu0 0.0
        %345 = vmatprep.subr.mxu0 0.0
        %346 = vmatpush1.msra.mxu0 0.0
        %347 = vmatprep.subr.mxu0 0.0
        %348 = vmatpush1.msra.mxu0 0.0
        %349 = vmatprep.subr.mxu0 0.0
        %350 = vmatpush1.msra.mxu0 0.0
        %351 = vmatprep.subr.mxu0 0.0
        %352 = vmatpush1.msra.mxu0 0.0
        %353 = vmatprep.subr.mxu0 0.0
        %354 = vmatpush1.msra.mxu0 0.0
        %355 = vmatprep.subr.mxu0 0.0
        %356 = vmatpush1.msra.mxu0 0.0
        %357 = vmatprep.subr.mxu0 0.0
        %358 = vmatpush1.msra.mxu0 0.0
        %359 = vmatprep.subr.mxu0 0.0
        %360 = vmatpush1.msra.mxu0 0.0
        %361 = vmatprep.subr.mxu0 0.0
        %362 = vmatpush1.msra.mxu0 0.0
        %363 = vmatprep.subr.mxu0 0.0
        %364 = vmatpush1.msra.mxu0 0.0
        %365 = vmatprep.subr.mxu0 0.0
        %366 = vmatpush1.msra.mxu0 0.0
        %367 = vmatprep.subr.mxu0 0.0
        %368 = vmatpush1.msra.mxu0 0.0
        %369 = vmatprep.subr.mxu0 0.0
        %370 = vmatpush1.msra.mxu0 0.0
        %371 = vmatprep.subr.mxu0 0.0
        %372 = vmatpush1.msra.mxu0 0.0
        %373 = vmatprep.subr.mxu0 0.0
        %374 = vmatpush1.msra.mxu0 0.0
        %375 = vmatprep.subr.mxu0 0.0
        %376 = vmatpush1.msra.mxu0 0.0
        %377 = vmatprep.subr.mxu0 0.0
        %378 = vmatpush1.msra.mxu0 0.0
        %379 = vmatprep.subr.mxu0 0.0
        %380 = vmatpush1.msra.mxu0 0.0
        %381 = vmatprep.subr.mxu0 0.0
        %382 = vmatpush1.msra.mxu0 0.0
        %383 = vmatprep.subr.mxu0 0.0
        %384 = vmatpush1.msra.mxu0 0.0
        %385 = vmatprep.subr.mxu0 0.0
        %386 = vmatpush1.msra.mxu0 0.0
        %387 = vmatprep.subr.mxu0 0.0
        %388 = vmatpush1.msra.mxu0 0.0
        %389 = vmatprep.subr.mxu0 0.0
        %390 = vmatpush1.msra.mxu0 0.0
        %391 = vmatprep.subr.mxu0 0.0
        %392 = vmatpush1.msra.mxu0 0.0
        %393 = vmatprep.mubr.f32.mxu0 0.0
        %394 = vmatmul.mubr.f32.gmra.mrb[0].mxu0 %v282
        %v395 = vpop.f32.mrb[0].mxu0
        %v396 = vadd.f32 %v278, %v395
        %v397 = vpop.f32.mrb[0].mxu0
        %398 = vmatprep.mubr.f32.mxu0 0.0
        %399 = vmatmul.mubr.f32.gmra.mrb[0].mxu0 %v285
        %v400 = vpop.f32.mrb[0].mxu0
        %v401 = vadd.f32 %v278, %v400
        %v402 = vpop.f32.mrb[0].mxu0
        %403 = vmatprep.mubr.f32.mxu0 0.0
        %404 = vmatmul.mubr.f32.gmra.mrb[0].mxu0 %v288
        %v405 = vpop.f32.mrb[0].mxu0
        %v406 = vadd.f32 %v278, %v405
        %v407 = vpop.f32.mrb[0].mxu0
        %408 = vmatprep.mubr.f32.mxu0 0.0
        %409 = vmatmul.mubr.f32.gmra.mrb[0].mxu0 %v291
        %v410 = vpop.f32.mrb[0].mxu0
        %v411 = vadd.f32 %v278, %v410
        %v412 = vpop.f32.mrb[0].mxu0
        %413 = vmatprep.mubr.f32.mxu0 0.0
        %414 = vmatmul.mubr.f32.gmra.mrb[0].mxu0 %v294
        %v415 = vpop.f32.mrb[0].mxu0
        %v416 = vadd.f32 %v278, %v415
        %v417 = vpop.f32.mrb[0].mxu0
        %418 = vmatprep.mubr.f32.mxu0 0.0
        %419 = vmatmul.mubr.f32.gmra.mrb[0].mxu0 %v297
        %v420 = vpop.f32.mrb[0].mxu0
        %v421 = vadd.f32 %v278, %v420
        %v422 = vpop.f32.mrb[0].mxu0
        %423 = vmatprep.mubr.f32.mxu0 0.0
        %424 = vmatmul.mubr.f32.gmra.mrb[0].mxu0 %v300
        %v425 = vpop.f32.mrb[0].mxu0
        %v426 = vadd.f32 %v278, %v425
        %v427 = vpop.f32.mrb[0].mxu0
        %428 = vmatprep.mubr.f32.mxu0 0.0
        %429 = vmatmul.mubr.f32.gmra.mrb[0].mxu0 %v303
        %v430 = vpop.f32.mrb[0].mxu0
        %v431 = vadd.f32 %v278, %v430
        %v432 = vpop.f32.mrb[0].mxu0
        %433 = vmatprep.mubr.f32.mxu0 0.0
        %434 = vmatmul.mubr.f32.gmra.mrb[0].mxu0 %v306
        %v435 = vpop.f32.mrb[0].mxu0
        %v436 = vadd.f32 %v278, %v435
        %v437 = vpop.f32.mrb[0].mxu0
        %438 = vmatprep.mubr.f32.mxu0 0.0
        %439 = vmatmul.mubr.f32.gmra.mrb[0].mxu0 %v309
        %v440 = vpop.f32.mrb[0].mxu0
        %v441 = vadd.f32 %v278, %v440
        %v442 = vpop.f32.mrb[0].mxu0
        %443 = vmatprep.mubr.f32.mxu0 0.0
        %444 = vmatmul.mubr.f32.gmra.mrb[0].mxu0 %v312
        %v445 = vpop.f32.mrb[0].mxu0
        %v446 = vadd.f32 %v278, %v445
        %v447 = vpop.f32.mrb[0].mxu0
        %448 = vmatprep.mubr.f32.mxu0 0.0
        %449 = vmatmul.mubr.f32.gmra.mrb[0].mxu0 %v315
        %v450 = vpop.f32.mrb[0].mxu0
        %v451 = vadd.f32 %v278, %v450
        %v452 = vpop.f32.mrb[0].mxu0
        %453 = vmatprep.mubr.f32.mxu0 0.0
        %454 = vmatmul.mubr.f32.gmra.mrb[0].mxu0 %v318
        %v455 = vpop.f32.mrb[0].mxu0
        %v456 = vadd.f32 %v278, %v455
        %v457 = vpop.f32.mrb[0].mxu0
        %458 = vmatprep.mubr.f32.mxu0 0.0
        %459 = vmatmul.mubr.f32.gmra.mrb[0].mxu0 %v321
        %v460 = vpop.f32.mrb[0].mxu0
        %v461 = vadd.f32 %v278, %v460
        %v462 = vpop.f32.mrb[0].mxu0
        %463 = vmatprep.mubr.f32.mxu0 0.0
        %464 = vmatmul.mubr.f32.gmra.mrb[0].mxu0 %v324
        %v465 = vpop.f32.mrb[0].mxu0
        %v466 = vadd.f32 %v278, %v465
        %v467 = vpop.f32.mrb[0].mxu0
        %468 = vmatprep.mubr.f32.mxu0 0.0
        %469 = vmatmul.mubr.f32.gmra.mrb[0].mxu0 %v327
        %v470 = vpop.f32.mrb[0].mxu0
        %v471 = vadd.f32 %v278, %v470
        %v472 = vpop.f32.mrb[0].mxu0
        %473 = vdwg.mxu0
        %v474 = vmax.f32 %v396, 0.0
        %v475 = vmax.f32 %v401, 0.0
        %v476 = vmax.f32 %v406, 0.0
        %v477 = vmax.f32 %v411, 0.0
        %v478 = vmax.f32 %v416, 0.0
        %v479 = vmax.f32 %v421, 0.0
        %v480 = vmax.f32 %v426, 0.0
        %v481 = vmax.f32 %v431, 0.0
        %v482 = vmax.f32 %v436, 0.0
        %v483 = vmax.f32 %v441, 0.0
        %v484 = vmax.f32 %v446, 0.0
        %v485 = vmax.f32 %v451, 0.0
        %v486 = vmax.f32 %v456, 0.0
        %v487 = vmax.f32 %v461, 0.0
        %v488 = vmax.f32 %v466, 0.0
        %v489 = vmax.f32 %v471, 0.0
        %v490 = vld [vmem:[%s5] sm:$0x1]
        %s491 = sld [smem:[#allocation3]]
        %v492 = vstv %s491
        %vm493 = vcmask 130048
        %v495 = vsel %vm493, %v490, 0
        %v498 = vsel %vm493, %v474, 0
        %v501 = vsel %vm493, %v475, 0
        %v504 = vsel %vm493, %v476, 0
        %v507 = vsel %vm493, %v477, 0
        %v510 = vsel %vm493, %v478, 0
        %v513 = vsel %vm493, %v479, 0
        %v516 = vsel %vm493, %v480, 0
        %v519 = vsel %vm493, %v481, 0
        %v522 = vsel %vm493, %v482, 0
        %v525 = vsel %vm493, %v483, 0
        %v528 = vsel %vm493, %v484, 0
        %v531 = vsel %vm493, %v485, 0
        %v534 = vsel %vm493, %v486, 0
        %v537 = vsel %vm493, %v487, 0
        %v540 = vsel %vm493, %v488, 0
        %v543 = vsel %vm493, %v489, 0
        %545 = vmatprep.subr.mxu0 0.0
        %546 = vmatpush1.xpose.msra.mxu0 %v498
        %547 = vmatprep.subr.mxu0 0.0
        %548 = vmatpush1.xpose.msra.mxu0 %v501
        %549 = vmatprep.subr.mxu0 0.0
        %550 = vmatpush1.xpose.msra.mxu0 %v504
        %551 = vmatprep.subr.mxu0 0.0
        %552 = vmatpush1.xpose.msra.mxu0 %v507
        %553 = vmatprep.subr.mxu0 0.0
        %554 = vmatpush1.xpose.msra.mxu0 %v510
        %555 = vmatprep.subr.mxu0 0.0
        %556 = vmatpush1.xpose.msra.mxu0 %v513
        %557 = vmatprep.subr.mxu0 0.0
        %558 = vmatpush1.xpose.msra.mxu0 %v516
        %559 = vmatprep.subr.mxu0 0.0
        %560 = vmatpush1.xpose.msra.mxu0 %v519
        %561 = vmatprep.subr.mxu0 0.0
        %562 = vmatpush1.xpose.msra.mxu0 %v522
        %563 = vmatprep.subr.mxu0 0.0
        %564 = vmatpush1.xpose.msra.mxu0 %v525
        %565 = vmatprep.subr.mxu0 0.0
        %566 = vmatpush1.xpose.msra.mxu0 %v528
        %567 = vmatprep.subr.mxu0 0.0
        %568 = vmatpush1.xpose.msra.mxu0 %v531
        %569 = vmatprep.subr.mxu0 0.0
        %570 = vmatpush1.xpose.msra.mxu0 %v534
        %571 = vmatprep.subr.mxu0 0.0
        %572 = vmatpush1.xpose.msra.mxu0 %v537
        %573 = vmatprep.subr.mxu0 0.0
        %574 = vmatpush1.xpose.msra.mxu0 %v540
        %575 = vmatprep.subr.mxu0 0.0
        %576 = vmatpush1.xpose.msra.mxu0 %v543
        %577 = vmatprep.subr.mxu0 0.0
        %578 = vmatpush1.xpose.msra.mxu0 0.0
        %579 = vmatprep.subr.mxu0 0.0
        %580 = vmatpush1.xpose.msra.mxu0 0.0
        %581 = vmatprep.subr.mxu0 0.0
        %582 = vmatpush1.xpose.msra.mxu0 0.0
        %583 = vmatprep.subr.mxu0 0.0
        %584 = vmatpush1.xpose.msra.mxu0 0.0
        %585 = vmatprep.subr.mxu0 0.0
        %586 = vmatpush1.xpose.msra.mxu0 0.0
        %587 = vmatprep.subr.mxu0 0.0
        %588 = vmatpush1.xpose.msra.mxu0 0.0
        %589 = vmatprep.subr.mxu0 0.0
        %590 = vmatpush1.xpose.msra.mxu0 0.0
        %591 = vmatprep.subr.mxu0 0.0
        %592 = vmatpush1.xpose.msra.mxu0 0.0
        %593 = vmatprep.subr.mxu0 0.0
        %594 = vmatpush1.xpose.msra.mxu0 0.0
        %595 = vmatprep.subr.mxu0 0.0
        %596 = vmatpush1.xpose.msra.mxu0 0.0
        %597 = vmatprep.subr.mxu0 0.0
        %598 = vmatpush1.xpose.msra.mxu0 0.0
        %599 = vmatprep.subr.mxu0 0.0
        %600 = vmatpush1.xpose.msra.mxu0 0.0
        %601 = vmatprep.subr.mxu0 0.0
        %602 = vmatpush1.xpose.msra.mxu0 0.0
        %603 = vmatprep.subr.mxu0 0.0
        %604 = vmatpush1.xpose.msra.mxu0 0.0
        %605 = vmatprep.subr.mxu0 0.0
        %606 = vmatpush1.xpose.msra.mxu0 0.0
        %607 = vmatprep.subr.mxu0 0.0
        %608 = vmatpush1.xpose.msra.mxu0 0.0
        %609 = vmatprep.mubr.f32.mxu0 0.0
        %610 = vmatmul.mubr.f32.gmra.mrb[0].mxu0 %v495
        %v611 = vpop.f32.mrb[0].mxu0
        %v612 = vadd.f32 %v492, %v611
        %v613 = vpop.f32.mrb[0].mxu0
        %614 = vdwg.mxu0
        %615 = vst [vmem:[%s246] sm:$0x1] %v612
        %s616 = sand.u32 %s161, 1
        %s617 = scalar_lea.sflag [#allocation5], %s616
        %s618 = sand.u32 %s161, 1
        %s619 = scalar_lea.vmem [#allocation4], %s618
        // Predicated region
        $region45: #{tpu_custom_call.1} parent=43 // pred_check
          %p620 = pneg %p171
        $region46: #{tpu_custom_call.1} parent=43 // pred_check_branch
          %622 = sbr.rel (%p620) target = $region48
        $region47: #{tpu_custom_call.1} parent=43 // pred_region
          %s624 = ssub.s32 16, 16
          %625 = vsyncadd %s617, %s624
          %s626 = smul.addr %s22, 16
          %s627 = scalar_lea.hbm %s6, %s626
          %s629 = sshll.u32 %s619, 4
          %s630 = int_to_ptr.vmem [resolvable:$true] %s629
          %632 = dma.vmem_to_hbm [thread:$0]  %s630, 16, %s627, %s617
        $region48: #{tpu_custom_call.1} parent=43 // pred_fallthru
          _
      $region44: #{tpu_custom_call.1} parent=5 // pred_fallthru
        _
      %p633 = scmp.le.s32.totalorder 2, %s17
      // Predicated region
      $region49: #{tpu_custom_call.1} parent=5 // pred_check
        %p634 = pneg %p633
      $region50: #{tpu_custom_call.1} parent=5 // pred_check_branch
        %636 = sbr.rel (%p634) target = $region52
      $region51: #{tpu_custom_call.1} parent=5 // pred_region
        %s637 = ssub.s32 %s17, 2
        // Predicated region
        $region53: #{tpu_custom_call.1} parent=51 // pred_check
          %p638 = pneg %p177
        $region54: #{tpu_custom_call.1} parent=51 // pred_check_branch
          %640 = sbr.rel (%p638) target = $region56
        $region55: #{tpu_custom_call.1} parent=51 // pred_region
          %s641 = sand.u32 %s162, 1
          %s642 = scalar_lea.sflag [#allocation5], %s641
          %s643 = sand.u32 %s162, 1
          %s644 = scalar_lea.vmem [#allocation4], %s643
          %645 = dma.done %s642, 16
        $region56: #{tpu_custom_call.1} parent=51 // pred_fallthru
          _
      $region52: #{tpu_custom_call.1} parent=5 // pred_fallthru
        _
    $region6: #{tpu_custom_call.1} parent=1 // loop_footer
      %s21 = sadd.s32 1, %s17
    $region7: #{tpu_custom_call.1} parent=1 // loop_footer_branch
      %16 = sbr.rel target = $region3
    $region8: #{tpu_custom_call.1} parent=1 // loop_exit
      _
    %646 = vsyncpa [#allocation5], 1
    %s647 = scalar_lea.sflag [#allocation5], 1
    %648 = vsyncpa %s647, 1

</llo_original>
